<compile_context>
chip_gen: v6e
topology: v6e:2x2x1
jax: 0.10.0
libtpu: 0.0.40
codegen_flags: <defaults>
</compile_context>

<pallas_src>
import jax
import jax.numpy as jnp
from jax.experimental import pallas as pl
from jax.experimental.pallas import tpu as pltpu


def _conv_mm_kernel(p_ref, w_ref, b_ref, o_ref):
    # w_ref: (Cout, K)      bf16  (constant index_map -> stays resident in VMEM)
    # p_ref: (K, OH*OW)     bf16  patch matrix of the current image
    # b_ref: (Cout, 1)      f32
    # o_ref: (Cout, OH*OW)  f32   channel-major tile -> NCHW with a free reshape
    acc = jnp.dot(w_ref[...], p_ref[...], preferred_element_type=jnp.float32)
    o_ref[...] = acc + b_ref[...]


def conv_big_forward(x, weight, bias):
    """Conv2d(Cin -> Cout, k=3, stride=1, padding=0) with bias.

    x:      (N, Cin, H, W)      float32   (NCHW, PyTorch layout)
    weight: (Cout, Cin, KH, KW) float32   (OIHW, PyTorch layout)
    bias:   (Cout,)             float32
    returns (N, Cout, OH, OW)   float32
    """
    N, Cin, H, W = x.shape
    Cout, _, KH, KW = weight.shape
    OH, OW = H - KH + 1, W - KW + 1
    K = KH * KW * Cin
    OHW = OH * OW

    # --- tiny glue (fuses in XLA): bf16 cast + im2col kept in NCHW ----------
    xb = x.astype(jnp.bfloat16)
    # patches[n, (i*KW + j)*Cin + c, oh*OW + ow] = x[n, c, oh+i, ow+j]
    patches = jnp.concatenate(
        [xb[:, :, i:i + OH, j:j + OW] for i in range(KH) for j in range(KW)],
        axis=1).reshape(N, K, OHW)
    # weight[co, c, i, j] -> w_mat[co, (i*KW + j)*Cin + c]
    w_mat = jnp.transpose(weight, (0, 2, 3, 1)).reshape(Cout, K).astype(jnp.bfloat16)
    b_mat = bias.astype(jnp.float32).reshape(Cout, 1)

    # --- hot path: one Pallas matmul + bias per image ------------------------
    out = pl.pallas_call(
        _conv_mm_kernel,
        out_shape=jax.ShapeDtypeStruct((N, Cout, OHW), jnp.float32),
        grid_spec=pltpu.PrefetchScalarGridSpec(
            num_scalar_prefetch=0,
            grid=(N,),
            in_specs=[
                pl.BlockSpec((None, K, OHW), lambda n: (n, 0, 0)),  # patches (per image)
                pl.BlockSpec((Cout, K), lambda n: (0, 0)),          # weight (resident)
                pl.BlockSpec((Cout, 1), lambda n: (0, 0)),          # bias   (resident)
            ],
            out_specs=pl.BlockSpec((None, Cout, OHW), lambda n: (n, 0, 0)),
        ),
        compiler_params=pltpu.CompilerParams(
            dimension_semantics=("parallel",)),
        cost_estimate=pl.CostEstimate(
            flops=2 * N * OHW * K * Cout,
            transcendentals=0,
            bytes_accessed=(N * K * OHW * 2        # bf16 patches
                            + Cout * K * 2         # bf16 weight
                            + Cout * 4             # f32 bias
                            + N * Cout * OHW * 4)  # f32 output
        ),
    )(patches, w_mat, b_mat)

    # Trailing-dim split is a metadata-only reshape: output is already NCHW-ordered.
    return out.reshape(N, Cout, OH, OW)


if __name__ == "__main__":
    key = jax.random.PRNGKey(0)
    kx, kw, kb = jax.random.split(key, 3)

    N, Cin, H, W = 2, 3, 16, 16
    Cout, KH, KW = 256, 3, 3

    x = jax.random.normal(kx, (N, Cin, H, W), dtype=jnp.float32)

    # Deterministic parameter init mimicking PyTorch Conv2d default
    # (uniform(-1/sqrt(fan_in), 1/sqrt(fan_in))).
    fan_in = Cin * KH * KW
    bound = 1.0 / (fan_in ** 0.5)
    weight = jax.random.uniform(kw, (Cout, Cin, KH, KW), jnp.float32,
                                minval=-bound, maxval=bound)
    bias = jax.random.uniform(kb, (Cout,), jnp.float32,
                              minval=-bound, maxval=bound)

    conv_fn = jax.jit(conv_big_forward)
    y = jax.block_until_ready(conv_fn(x, weight, bias))

    # Reference check against XLA's conv (same NCHW/OIHW semantics as PyTorch).
    y_ref = jax.lax.conv_general_dilated(
        x, weight, window_strides=(1, 1), padding="VALID",
        dimension_numbers=("NCHW", "OIHW", "NCHW"))
    y_ref = y_ref + bias.reshape(1, Cout, 1, 1)

    assert y.shape == (N, Cout, H - KH + 1, W - KW + 1), y.shape
    # bf16 matmul operands (f32 accumulate) -> loosened tolerance vs f32 reference,
    # as anticipated in the review (expected quantization error, not a kernel bug).
    assert jnp.allclose(y, y_ref, atol=3e-2, rtol=3e-2), "mismatch vs lax conv"

    print("KERNEL_OK")
</pallas_src>

<mosaic_0001>
module attributes {stable_mosaic.version = 11 : i64} {
  func.func @_conv_mm_kernel(%arg0: i32, %arg1: memref<1x27x196xbf16, #tpu.memory_space<vmem>>, %arg2: memref<256x27xbf16, #tpu.memory_space<vmem>>, %arg3: memref<256x1xf32, #tpu.memory_space<vmem>>, %arg4: memref<1x256x196xf32, #tpu.memory_space<vmem>>) attributes {dimension_semantics = [#tpu.dimension_semantics<parallel>], iteration_bounds = array<i64: 2>, scalar_prefetch = 0 : i64, scratch_operands = 0 : i64, tpu.core_type = #tpu.core_type<tc>, window_params = [{transform_indices = @transform_0, window_bounds = array<i64: 1, 27, 196>}, {pipeline_mode = #tpu.pipeline_mode<synchronous>, transform_indices = @transform_1, window_bounds = array<i64: 256, 27>}, {pipeline_mode = #tpu.pipeline_mode<synchronous>, transform_indices = @transform_2, window_bounds = array<i64: 256, 1>}, {transform_indices = @transform_3, window_bounds = array<i64: 1, 256, 196>}]} {
    %c0 = arith.constant 0 : index
    %c0_0 = arith.constant 0 : index
    %0 = vector.load %arg2[%c0, %c0_0] : memref<256x27xbf16, #tpu.memory_space<vmem>>, vector<256x27xbf16>
    %c0_1 = arith.constant 0 : index
    %c0_2 = arith.constant 0 : index
    %c0_3 = arith.constant 0 : index
    %1 = vector.load %arg1[%c0_1, %c0_2, %c0_3] : memref<1x27x196xbf16, #tpu.memory_space<vmem>>, vector<1x27x196xbf16>
    %2 = vector.shape_cast %1 : vector<1x27x196xbf16> to vector<27x196xbf16>
    %cst = arith.constant dense<0.000000e+00> : vector<256x196xf32>
    %3 = tpu.matmul %0, %2, %cst {dimension_numbers = #tpu.dot_dimension_numbers<[1], [0], [0], [1], [0, 0, 1, 1], [], []>} : vector<256x27xbf16>, vector<27x196xbf16>, vector<256x196xf32> -> vector<256x196xf32>
    %c0_4 = arith.constant 0 : index
    %c0_5 = arith.constant 0 : index
    %4 = vector.load %arg3[%c0_4, %c0_5] : memref<256x1xf32, #tpu.memory_space<vmem>>, vector<256x1xf32>
    %5 = vector.broadcast %4 : vector<256x1xf32> to vector<256x196xf32>
    %6 = arith.addf %3, %5 : vector<256x196xf32>
    %c0_6 = arith.constant 0 : index
    %c0_7 = arith.constant 0 : index
    %c0_8 = arith.constant 0 : index
    %7 = vector.load %arg4[%c0_6, %c0_7, %c0_8] : memref<1x256x196xf32, #tpu.memory_space<vmem>>, vector<1x256x196xf32>
    %8 = vector.shape_cast %7 : vector<1x256x196xf32> to vector<256x196xf32>
    %9 = vector.shape_cast %6 : vector<256x196xf32> to vector<1x256x196xf32>
    tpu.vector_store %arg4[%c0_6, %c0_7, %c0_8], %9 {strides = array<i32>} : memref<1x256x196xf32, #tpu.memory_space<vmem>>, vector<1x256x196xf32>,
    return
  }
  func.func @transform_0(%arg0: i32) -> (i32, i32, i32) {
    %c0_i32 = arith.constant 0 : i32
    %c0_i32_0 = arith.constant 0 : i32
    %c0_i32_1 = arith.constant 0 : i32
    return %arg0, %c0_i32, %c0_i32_0 : i32, i32, i32
  }
  func.func @transform_1(%arg0: i32) -> (i32, i32) {
    %c0_i32 = arith.constant 0 : i32
    %c0_i32_0 = arith.constant 0 : i32
    %c0_i32_1 = arith.constant 0 : i32
    return %c0_i32, %c0_i32_0 : i32, i32
  }
  func.func @transform_2(%arg0: i32) -> (i32, i32) {
    %c0_i32 = arith.constant 0 : i32
    %c0_i32_0 = arith.constant 0 : i32
    %c0_i32_1 = arith.constant 0 : i32
    return %c0_i32, %c0_i32_0 : i32, i32
  }
  func.func @transform_3(%arg0: i32) -> (i32, i32, i32) {
    %c0_i32 = arith.constant 0 : i32
    %c0_i32_0 = arith.constant 0 : i32
    %c0_i32_1 = arith.constant 0 : i32
    return %arg0, %c0_i32, %c0_i32_0 : i32, i32, i32
  }
}

</mosaic_0001>

<llo_original>
// kernel: conv_big_forward.1
$region0: #{conv_big_forward.1}
  #allocation0 [shape = 'u32[]', space=smem, size = 0x4, offset = 0x4, fixed_abs, tag = 'smem constant byte address 0x4 - core index']
  #allocation1 [shape = 'u32[144,128]{1,0:T(1,128)}', space=vmem, size = 0x12000, scoped, tag = 'internal scratch']
  %s0 = inlined_call_operand.vmem [shape: bf16[2,27,196], index: 0, kind: input, shape index: {}]
  %s1 = inlined_call_operand.vmem [shape: bf16[256,27], index: 1, kind: input, shape index: {}]
  %s2 = inlined_call_operand.vmem [shape: f32[256,1], index: 2, kind: input, shape index: {}]
  %s3 = inlined_call_operand.vmem [shape: f32[2,256,196], index: 3, kind: output, shape index: {}]
  %s4 = sld [smem:[#allocation0]]
  $region45: #{conv_big_forward.1} parent=0
    _
  %s6 = ssub.s32 1, %s4
  %s7 = scalar_select 0, %s6, %s4
  loop: start=0, step=1, limit=4
  $region2: #{conv_big_forward.1} parent=0 // loop_pre_header
    _
  $region3: #{conv_big_forward.1} parent=0 // loop_header
    %s9 = sphi 0, %s13
    %p10 = scmp.ge.s32.totalorder %s9, 4
    %s19 = sphi 0, %s21
    %s22 = sphi 0, %s19
    %s23 = sphi 0, %s22
    %s39 = sphi 0, %s23
    %s43 = sphi 0, %s43
    %s45 = sphi 0, %s43
    %s46 = sphi 0, %s45
    %s60 = sphi 0, %s46
    %s64 = sphi 0, %s64
    %s66 = sphi 0, %s64
    %s67 = sphi 0, %s66
    %s81 = sphi 0, %s67
    %s87 = sphi 0, %s89
    %s90 = sphi 0, %s87
    %s91 = sphi 0, %s90
    %s107 = sphi 0, %s91
  $region4: #{conv_big_forward.1} parent=0 // loop_header_branch
    %12 = sbr.rel (%p10) target = $region8
  $region5: #{conv_big_forward.1} parent=0 // loop_body
    %s14 = ssub.s32 %s9, 1
    %s15 = ssub.s32 %s9, 2
    %s16 = sadd.s32 %s9, 1
    %s17 = ssub.s32 %s9, %s16
    %p18 = scmp.eq.s32.totalorder %s17, 0
    %s20 = sadd.s32 %s19, 1
    %s21 = scalar_select %p18, %s19, %s20
    %p24 = pneg %p18
    %p25 = scmp.eq.s32.totalorder %s9, 1
    %p26 = por %p24, %p25
    %p27 = scmp.ne.s32.totalorder %s19, %s22
    %p28 = scmp.eq.s32.totalorder %s9, 0
    %p29 = por %p27, %p28
    %p30 = scmp.ne.s32.totalorder %s19, %s22
    %p31 = scmp.eq.s32.totalorder %s14, 1
    %p32 = por %p30, %p31
    %p33 = scmp.ne.s32.totalorder %s22, %s23
    %p34 = scmp.eq.s32.totalorder %s14, 0
    %p35 = por %p33, %p34
    %p36 = scmp.ne.s32.totalorder %s22, %s23
    %p37 = scmp.eq.s32.totalorder %s15, 1
    %p38 = por %p36, %p37
    %p40 = scmp.ne.s32.totalorder %s23, %s39
    %p41 = scmp.eq.s32.totalorder %s15, 0
    %p42 = por %p40, %p41
    %s44 = sadd.s32 %s43, 1
    %p47 = scmp.eq.s32.totalorder %s9, 1
    %p48 = scmp.ne.s32.totalorder %s43, %s45
    %p49 = scmp.eq.s32.totalorder %s9, 0
    %p50 = por %p48, %p49
    %p51 = scmp.ne.s32.totalorder %s43, %s45
    %p52 = scmp.eq.s32.totalorder %s14, 1
    %p53 = por %p51, %p52
    %p54 = scmp.ne.s32.totalorder %s45, %s46
    %p55 = scmp.eq.s32.totalorder %s14, 0
    %p56 = por %p54, %p55
    %p57 = scmp.ne.s32.totalorder %s45, %s46
    %p58 = scmp.eq.s32.totalorder %s15, 1
    %p59 = por %p57, %p58
    %p61 = scmp.ne.s32.totalorder %s46, %s60
    %p62 = scmp.eq.s32.totalorder %s15, 0
    %p63 = por %p61, %p62
    %s65 = sadd.s32 %s64, 1
    %p68 = scmp.eq.s32.totalorder %s9, 1
    %p69 = scmp.ne.s32.totalorder %s64, %s66
    %p70 = scmp.eq.s32.totalorder %s9, 0
    %p71 = por %p69, %p70
    %p72 = scmp.ne.s32.totalorder %s64, %s66
    %p73 = scmp.eq.s32.totalorder %s14, 1
    %p74 = por %p72, %p73
    %p75 = scmp.ne.s32.totalorder %s66, %s67
    %p76 = scmp.eq.s32.totalorder %s14, 0
    %p77 = por %p75, %p76
    %p78 = scmp.ne.s32.totalorder %s66, %s67
    %p79 = scmp.eq.s32.totalorder %s15, 1
    %p80 = por %p78, %p79
    %p82 = scmp.ne.s32.totalorder %s67, %s81
    %p83 = scmp.eq.s32.totalorder %s15, 0
    %p84 = por %p82, %p83
    %s85 = ssub.s32 %s9, %s16
    %p86 = scmp.eq.s32.totalorder %s85, 0
    %s88 = sadd.s32 %s87, 1
    %s89 = scalar_select %p86, %s87, %s88
    %p92 = pneg %p86
    %p93 = scmp.eq.s32.totalorder %s9, 1
    %p94 = por %p92, %p93
    %p95 = scmp.ne.s32.totalorder %s87, %s90
    %p96 = scmp.eq.s32.totalorder %s9, 0
    %p97 = por %p95, %p96
    %p98 = scmp.ne.s32.totalorder %s87, %s90
    %p99 = scmp.eq.s32.totalorder %s14, 1
    %p100 = por %p98, %p99
    %p101 = scmp.ne.s32.totalorder %s90, %s91
    %p102 = scmp.eq.s32.totalorder %s14, 0
    %p103 = por %p101, %p102
    %p104 = scmp.ne.s32.totalorder %s90, %s91
    %p105 = scmp.eq.s32.totalorder %s15, 1
    %p106 = por %p104, %p105
    %p108 = scmp.ne.s32.totalorder %s91, %s107
    %p109 = scmp.eq.s32.totalorder %s15, 0
    %p110 = por %p108, %p109
    %p111 = scmp.le.s32.totalorder 1, %s9
    %p112 = scmp.lt.s32.totalorder %s9, 3
    %p113 = pnand %p111, %p112
    %p114 = pneg %p113
    // Predicated region
    $region9: #{conv_big_forward.1} parent=5 // pred_check
      _
    $region10: #{conv_big_forward.1} parent=5 // pred_check_branch
      %116 = sbr.rel (%p113) target = $region12
    $region11: #{conv_big_forward.1} parent=5 // pred_region
      %s117 = ssub.s32 %s9, 1
      // Predicated region
      $region13: #{conv_big_forward.1} parent=11 // pred_check
        %p118 = pneg %p56
      $region14: #{conv_big_forward.1} parent=11 // pred_check_branch
        %120 = sbr.rel (%p118) target = $region16
      $region15: #{conv_big_forward.1} parent=11 // pred_region
        _
      $region16: #{conv_big_forward.1} parent=11 // pred_fallthru
        _
      // Predicated region
      $region17: #{conv_big_forward.1} parent=11 // pred_check
        %p121 = pneg %p77
      $region18: #{conv_big_forward.1} parent=11 // pred_check_branch
        %123 = sbr.rel (%p121) target = $region20
      $region19: #{conv_big_forward.1} parent=11 // pred_region
        _
      $region20: #{conv_big_forward.1} parent=11 // pred_fallthru
        _
    $region12: #{conv_big_forward.1} parent=5 // pred_fallthru
      _
    %p124 = scmp.lt.s32.totalorder %s9, 2
    // Predicated region
    $region21: #{conv_big_forward.1} parent=5 // pred_check
      %p125 = pneg %p124
    $region22: #{conv_big_forward.1} parent=5 // pred_check_branch
      %127 = sbr.rel (%p125) target = $region24
    $region23: #{conv_big_forward.1} parent=5 // pred_region
      // Predicated region
      $region25: #{conv_big_forward.1} parent=23 // pred_check
        %p128 = pneg %p29
      $region26: #{conv_big_forward.1} parent=23 // pred_check_branch
        %130 = sbr.rel (%p128) target = $region28
      $region27: #{conv_big_forward.1} parent=23 // pred_region
        %p131 = scmp.lt.s32.totalorder %s9, 1
        %s132 = scalar_select %p131, %s9, 1
        %s133 = smul.addr %s132, 8
        %s134 = smul.addr %s133, 4
        %s135 = scalar_lea.vmem %s0, %s134
      $region28: #{conv_big_forward.1} parent=23 // pred_fallthru
        _
    $region24: #{conv_big_forward.1} parent=5 // pred_fallthru
      _
    %p136 = scmp.le.s32.totalorder 1, %s9
    %p137 = scmp.lt.s32.totalorder %s9, 3
    %p138 = pnand %p136, %p137
    %p139 = pneg %p138
    // Predicated region
    $region29: #{conv_big_forward.1} parent=5 // pred_check
      _
    $region30: #{conv_big_forward.1} parent=5 // pred_check_branch
      %141 = sbr.rel (%p138) target = $region32
    $region31: #{conv_big_forward.1} parent=5 // pred_region
      %s142 = ssub.s32 %s9, 1
      %p143 = scmp.lt.s32.totalorder %s14, 1
      %s144 = scalar_select %p143, %s14, 1
      %s145 = smul.addr %s144, 8
      %s146 = smul.addr %s145, 4
      %s147 = scalar_lea.vmem %s0, %s146
      %p148 = pneg %p35
      %p149 = pneg %p32
      %p150 = pneg %p56
      %p151 = pneg %p53
      %p152 = pneg %p77
      %p153 = pneg %p74
      %p154 = pneg %p103
      %p155 = pneg %p100
      %p156 = scmp.lt.s32.totalorder %s14, 1
      %s157 = scalar_select %p156, %s14, 1
      %s158 = smul.addr %s157, 64
      %s159 = smul.addr %s158, 8
      %s160 = scalar_lea.vmem %s3, %s159
      %p161 = scmp.lt.s32.totalorder %s14, 1
      %s162 = scalar_select %p161, %s14, 1
      %s163 = smul.addr %s162, 8
      %s164 = smul.addr %s163, 4
      %s165 = scalar_lea.vmem %s0, %s164
      %p166 = scmp.lt.s32.totalorder %s14, 1
      %s167 = scalar_select %p166, %s14, 1
      %s168 = smul.addr %s167, 64
      %s169 = smul.addr %s168, 8
      %s170 = scalar_lea.vmem %s3, %s169
      %v172 = vld [vmem:[%s1] sm:$0xf]
      %v173 = vld [vmem:[%s1 + $0x4] sm:$0xf]
      %v174 = vld [vmem:[%s1 + $0x8] sm:$0xf]
      %v175 = vld [vmem:[%s1 + $0xc] sm:$0xf]
      %v176 = vld [vmem:[%s1 + $0x10] sm:$0xf]
      %v177 = vld [vmem:[%s1 + $0x14] sm:$0xf]
      %v178 = vld [vmem:[%s1 + $0x18] sm:$0xf]
      %v179 = vld [vmem:[%s1 + $0x1c] sm:$0xf]
      %v180 = vld [vmem:[%s1 + $0x20] sm:$0xf]
      %v181 = vld [vmem:[%s1 + $0x24] sm:$0xf]
      %v182 = vld [vmem:[%s1 + $0x28] sm:$0xf]
      %v183 = vld [vmem:[%s1 + $0x2c] sm:$0xf]
      %v184 = vld [vmem:[%s1 + $0x30] sm:$0xf]
      %v185 = vld [vmem:[%s1 + $0x34] sm:$0xf]
      %v186 = vld [vmem:[%s1 + $0x38] sm:$0xf]
      %v187 = vld [vmem:[%s1 + $0x3c] sm:$0xf]
      %v188 = vld [vmem:[%s1 + $0x40] sm:$0xf]
      %v189 = vld [vmem:[%s1 + $0x44] sm:$0xf]
      %v190 = vld [vmem:[%s1 + $0x48] sm:$0xf]
      %v191 = vld [vmem:[%s1 + $0x4c] sm:$0xf]
      %v192 = vld [vmem:[%s1 + $0x50] sm:$0xf]
      %v193 = vld [vmem:[%s1 + $0x54] sm:$0xf]
      %v194 = vld [vmem:[%s1 + $0x58] sm:$0xf]
      %v195 = vld [vmem:[%s1 + $0x5c] sm:$0xf]
      %v196 = vld [vmem:[%s1 + $0x60] sm:$0xf]
      %v197 = vld [vmem:[%s1 + $0x64] sm:$0xf]
      %v198 = vld [vmem:[%s1 + $0x68] sm:$0xf]
      %v199 = vld [vmem:[%s1 + $0x6c] sm:$0xf]
      %v200 = vld [vmem:[%s1 + $0x70] sm:$0xf]
      %v201 = vld [vmem:[%s1 + $0x74] sm:$0xf]
      %v202 = vld [vmem:[%s1 + $0x78] sm:$0xf]
      %v203 = vld [vmem:[%s1 + $0x7c] sm:$0xf]
      %v204 = vld [vmem:[%s165] sm:$0xff]
      %v205 = vld [vmem:[%s165 + $0x8] sm:$0xff]
      %v206 = vld [vmem:[%s165 + $0x10] sm:$0xff]
      %v207 = vld [vmem:[%s165 + $0x18] sm:$0x33]
      %v208 = vld [vmem:[%s2] sm:$0xff]
      %v209 = vld [vmem:[%s2 + $0x8] sm:$0xff]
      %v210 = vld [vmem:[%s2 + $0x10] sm:$0xff]
      %v211 = vld [vmem:[%s2 + $0x18] sm:$0xff]
      %v212 = vld [vmem:[%s2 + $0x20] sm:$0xff]
      %v213 = vld [vmem:[%s2 + $0x28] sm:$0xff]
      %v214 = vld [vmem:[%s2 + $0x30] sm:$0xff]
      %v215 = vld [vmem:[%s2 + $0x38] sm:$0xff]
      %v216 = vld [vmem:[%s2 + $0x40] sm:$0xff]
      %v217 = vld [vmem:[%s2 + $0x48] sm:$0xff]
      %v218 = vld [vmem:[%s2 + $0x50] sm:$0xff]
      %v219 = vld [vmem:[%s2 + $0x58] sm:$0xff]
      %v220 = vld [vmem:[%s2 + $0x60] sm:$0xff]
      %v221 = vld [vmem:[%s2 + $0x68] sm:$0xff]
      %v222 = vld [vmem:[%s2 + $0x70] sm:$0xff]
      %v223 = vld [vmem:[%s2 + $0x78] sm:$0xff]
      %v224 = vld [vmem:[%s2 + $0x80] sm:$0xff]
      %v225 = vld [vmem:[%s2 + $0x88] sm:$0xff]
      %v226 = vld [vmem:[%s2 + $0x90] sm:$0xff]
      %v227 = vld [vmem:[%s2 + $0x98] sm:$0xff]
      %v228 = vld [vmem:[%s2 + $0xa0] sm:$0xff]
      %v229 = vld [vmem:[%s2 + $0xa8] sm:$0xff]
      %v230 = vld [vmem:[%s2 + $0xb0] sm:$0xff]
      %v231 = vld [vmem:[%s2 + $0xb8] sm:$0xff]
      %v232 = vld [vmem:[%s2 + $0xc0] sm:$0xff]
      %v233 = vld [vmem:[%s2 + $0xc8] sm:$0xff]
      %v234 = vld [vmem:[%s2 + $0xd0] sm:$0xff]
      %v235 = vld [vmem:[%s2 + $0xd8] sm:$0xff]
      %v236 = vld [vmem:[%s2 + $0xe0] sm:$0xff]
      %v237 = vld [vmem:[%s2 + $0xe8] sm:$0xff]
      %v238 = vld [vmem:[%s2 + $0xf0] sm:$0xff]
      %v239 = vld [vmem:[%s2 + $0xf8] sm:$0xff]
      %241 = vset.pattern.permute.xlu0 0
      %242 = vperm.xlu0 %241, %v208
      %v243 = vpop.permute.xlu0 %242
      %246 = vset.pattern.permute.xlu0 0
      %247 = vperm.xlu0 %246, %v209
      %v248 = vpop.permute.xlu0 %247
      %251 = vset.pattern.permute.xlu0 0
      %252 = vperm.xlu0 %251, %v210
      %v253 = vpop.permute.xlu0 %252
      %256 = vset.pattern.permute.xlu0 0
      %257 = vperm.xlu0 %256, %v211
      %v258 = vpop.permute.xlu0 %257
      %261 = vset.pattern.permute.xlu0 0
      %262 = vperm.xlu0 %261, %v212
      %v263 = vpop.permute.xlu0 %262
      %266 = vset.pattern.permute.xlu0 0
      %267 = vperm.xlu0 %266, %v213
      %v268 = vpop.permute.xlu0 %267
      %271 = vset.pattern.permute.xlu0 0
      %272 = vperm.xlu0 %271, %v214
      %v273 = vpop.permute.xlu0 %272
      %276 = vset.pattern.permute.xlu0 0
      %277 = vperm.xlu0 %276, %v215
      %v278 = vpop.permute.xlu0 %277
      %281 = vset.pattern.permute.xlu0 0
      %282 = vperm.xlu0 %281, %v216
      %v283 = vpop.permute.xlu0 %282
      %286 = vset.pattern.permute.xlu0 0
      %287 = vperm.xlu0 %286, %v217
      %v288 = vpop.permute.xlu0 %287
      %291 = vset.pattern.permute.xlu0 0
      %292 = vperm.xlu0 %291, %v218
      %v293 = vpop.permute.xlu0 %292
      %296 = vset.pattern.permute.xlu0 0
      %297 = vperm.xlu0 %296, %v219
      %v298 = vpop.permute.xlu0 %297
      %301 = vset.pattern.permute.xlu0 0
      %302 = vperm.xlu0 %301, %v220
      %v303 = vpop.permute.xlu0 %302
      %306 = vset.pattern.permute.xlu0 0
      %307 = vperm.xlu0 %306, %v221
      %v308 = vpop.permute.xlu0 %307
      %311 = vset.pattern.permute.xlu0 0
      %312 = vperm.xlu0 %311, %v222
      %v313 = vpop.permute.xlu0 %312
      %316 = vset.pattern.permute.xlu0 0
      %317 = vperm.xlu0 %316, %v223
      %v318 = vpop.permute.xlu0 %317
      %321 = vset.pattern.permute.xlu0 0
      %322 = vperm.xlu0 %321, %v224
      %v323 = vpop.permute.xlu0 %322
      %326 = vset.pattern.permute.xlu0 0
      %327 = vperm.xlu0 %326, %v225
      %v328 = vpop.permute.xlu0 %327
      %331 = vset.pattern.permute.xlu0 0
      %332 = vperm.xlu0 %331, %v226
      %v333 = vpop.permute.xlu0 %332
      %336 = vset.pattern.permute.xlu0 0
      %337 = vperm.xlu0 %336, %v227
      %v338 = vpop.permute.xlu0 %337
      %341 = vset.pattern.permute.xlu0 0
      %342 = vperm.xlu0 %341, %v228
      %v343 = vpop.permute.xlu0 %342
      %346 = vset.pattern.permute.xlu0 0
      %347 = vperm.xlu0 %346, %v229
      %v348 = vpop.permute.xlu0 %347
      %351 = vset.pattern.permute.xlu0 0
      %352 = vperm.xlu0 %351, %v230
      %v353 = vpop.permute.xlu0 %352
      %356 = vset.pattern.permute.xlu0 0
      %357 = vperm.xlu0 %356, %v231
      %v358 = vpop.permute.xlu0 %357
      %361 = vset.pattern.permute.xlu0 0
      %362 = vperm.xlu0 %361, %v232
      %v363 = vpop.permute.xlu0 %362
      %366 = vset.pattern.permute.xlu0 0
      %367 = vperm.xlu0 %366, %v233
      %v368 = vpop.permute.xlu0 %367
      %371 = vset.pattern.permute.xlu0 0
      %372 = vperm.xlu0 %371, %v234
      %v373 = vpop.permute.xlu0 %372
      %376 = vset.pattern.permute.xlu0 0
      %377 = vperm.xlu0 %376, %v235
      %v378 = vpop.permute.xlu0 %377
      %381 = vset.pattern.permute.xlu0 0
      %382 = vperm.xlu0 %381, %v236
      %v383 = vpop.permute.xlu0 %382
      %386 = vset.pattern.permute.xlu0 0
      %387 = vperm.xlu0 %386, %v237
      %v388 = vpop.permute.xlu0 %387
      %391 = vset.pattern.permute.xlu0 0
      %392 = vperm.xlu0 %391, %v238
      %v393 = vpop.permute.xlu0 %392
      %396 = vset.pattern.permute.xlu0 0
      %397 = vperm.xlu0 %396, %v239
      %v398 = vpop.permute.xlu0 %397
      %v432 = vunpack.c.l.b16 %v172
      %v433 = vunpack.c.l.b16 %v173
      %v434 = vunpack.c.l.b16 %v174
      %v435 = vunpack.c.l.b16 %v175
      %v436 = vunpack.c.l.b16 %v176
      %v437 = vunpack.c.l.b16 %v177
      %v438 = vunpack.c.l.b16 %v178
      %v439 = vunpack.c.l.b16 %v179
      %v440 = vunpack.c.l.b16 %v180
      %v441 = vunpack.c.l.b16 %v181
      %v442 = vunpack.c.l.b16 %v182
      %v443 = vunpack.c.l.b16 %v183
      %v444 = vunpack.c.l.b16 %v184
      %v445 = vunpack.c.l.b16 %v185
      %v446 = vunpack.c.l.b16 %v186
      %v447 = vunpack.c.l.b16 %v187
      %v448 = vunpack.c.l.b16 %v188
      %v449 = vunpack.c.l.b16 %v189
      %v450 = vunpack.c.l.b16 %v190
      %v451 = vunpack.c.l.b16 %v191
      %v452 = vunpack.c.l.b16 %v192
      %v453 = vunpack.c.l.b16 %v193
      %v454 = vunpack.c.l.b16 %v194
      %v455 = vunpack.c.l.b16 %v195
      %v456 = vunpack.c.l.b16 %v196
      %v457 = vunpack.c.l.b16 %v197
      %v458 = vunpack.c.l.b16 %v198
      %v459 = vunpack.c.l.b16 %v199
      %v460 = vunpack.c.l.b16 %v200
      %v461 = vunpack.c.l.b16 %v201
      %v462 = vunpack.c.l.b16 %v202
      %v463 = vunpack.c.l.b16 %v203
      %v464 = vpack.c.b16 %v433, %v432
      %v465 = vpack.c.b16 %v435, %v434
      %v466 = vpack.c.b16 %v437, %v436
      %v467 = vpack.c.b16 %v439, %v438
      %v468 = vpack.c.b16 %v441, %v440
      %v469 = vpack.c.b16 %v443, %v442
      %v470 = vpack.c.b16 %v445, %v444
      %v471 = vpack.c.b16 %v447, %v446
      %v472 = vpack.c.b16 %v449, %v448
      %v473 = vpack.c.b16 %v451, %v450
      %v474 = vpack.c.b16 %v453, %v452
      %v475 = vpack.c.b16 %v455, %v454
      %v476 = vpack.c.b16 %v457, %v456
      %v477 = vpack.c.b16 %v459, %v458
      %v478 = vpack.c.b16 %v461, %v460
      %v479 = vpack.c.b16 %v463, %v462
      %v484 = vunpack.c.l.b16 %v204
      %v485 = vunpack.c.h.b16 %v204
      %v486 = vunpack.c.l.b16 %v205
      %v487 = vunpack.c.h.b16 %v205
      %v488 = vunpack.c.l.b16 %v206
      %v489 = vunpack.c.h.b16 %v206
      %v490 = vunpack.c.l.b16 %v207
      %v491 = vunpack.c.h.b16 %v207
      %v492 = vpack.c.b16 %v486, %v484
      %v493 = vpack.c.b16 %v487, %v485
      %v494 = vpack.c.b16 %v490, %v488
      %v495 = vpack.c.b16 %v491, %v489
      %vm498 = vcmask 220160
      %v500 = vsel %vm498, %v464, 0
      %v503 = vsel %vm498, %v465, 0
      %v506 = vsel %vm498, %v466, 0
      %v509 = vsel %vm498, %v467, 0
      %v512 = vsel %vm498, %v468, 0
      %v515 = vsel %vm498, %v469, 0
      %v518 = vsel %vm498, %v470, 0
      %v521 = vsel %vm498, %v471, 0
      %v524 = vsel %vm498, %v472, 0
      %v527 = vsel %vm498, %v473, 0
      %v530 = vsel %vm498, %v474, 0
      %v533 = vsel %vm498, %v475, 0
      %v536 = vsel %vm498, %v476, 0
      %v539 = vsel %vm498, %v477, 0
      %v542 = vsel %vm498, %v478, 0
      %v545 = vsel %vm498, %v479, 0
      %vm547 = vcmask 1044480
      %vm548 = vcmask 1045504
      %v549 = vsel %vm547, 4294967295, 65535
      %v550 = vsel %vm548, %v549, 0
      %v552 = vand.u32 %v494, %v550
      %v555 = vand.u32 %v495, %v550
      %557 = vmatprep.subr.bf16.mxu0 0
      %558 = vmatpush1.bf16.msra.mxu0 0
      %559 = vmatprep.subr.bf16.mxu0 0
      %560 = vmatpush1.bf16.msra.mxu0 0
      %561 = vmatprep.subr.bf16.mxu0 0
      %562 = vmatpush1.bf16.msra.mxu0 0
      %563 = vmatprep.subr.bf16.mxu0 0
      %564 = vmatpush1.bf16.msra.mxu0 0
      %565 = vmatprep.subr.bf16.mxu0 0
      %566 = vmatpush1.bf16.msra.mxu0 0
      %567 = vmatprep.subr.bf16.mxu0 0
      %568 = vmatpush1.bf16.msra.mxu0 0
      %569 = vmatprep.subr.bf16.mxu0 %v555
      %570 = vmatpush1.bf16.msra.mxu0 %v552
      %571 = vmatprep.subr.bf16.mxu0 %v493
      %572 = vmatpush1.bf16.msra.mxu0 %v492
      %573 = vmatprep.subr.bf16.mxu0 0
      %574 = vmatpush2.bf16.msra.mxu0 0
      %575 = vmatprep.subr.bf16.mxu0 0
      %576 = vmatpush2.bf16.msra.mxu0 0
      %577 = vmatprep.subr.bf16.mxu0 0
      %578 = vmatpush2.bf16.msra.mxu0 0
      %579 = vmatprep.subr.bf16.mxu0 0
      %580 = vmatpush2.bf16.msra.mxu0 0
      %581 = vmatprep.subr.bf16.mxu0 0
      %582 = vmatpush2.bf16.msra.mxu0 0
      %583 = vmatprep.subr.bf16.mxu0 0
      %584 = vmatpush2.bf16.msra.mxu0 0
      %585 = vmatprep.subr.bf16.mxu0 0
      %586 = vmatpush2.bf16.msra.mxu0 0
      %587 = vmatprep.subr.bf16.mxu0 0
      %588 = vmatpush2.bf16.msra.mxu0 0
      %589 = vmatprep.mubr.bf16.mxu0 0
      %590 = vmatmul.mubr.bf16.gmra.mxu0 %v500
      %v591 = vpop.f32.mrf.mxu0
      %v592 = vadd.f32 %v243, %v591
      %v593 = vpop.f32.mrf.mxu0
      %v594 = vadd.f32 %v243, %v593
      %v595 = vpop.f32.mrf.mxu0
      %v596 = vadd.f32 %v248, %v595
      %v597 = vpop.f32.mrf.mxu0
      %v598 = vadd.f32 %v248, %v597
      %599 = vmatprep.mubr.bf16.mxu0 0
      %600 = vmatmul.mubr.bf16.gmra.mxu0 %v503
      %v601 = vpop.f32.mrf.mxu0
      %v602 = vadd.f32 %v253, %v601
      %v603 = vpop.f32.mrf.mxu0
      %v604 = vadd.f32 %v253, %v603
      %v605 = vpop.f32.mrf.mxu0
      %v606 = vadd.f32 %v258, %v605
      %v607 = vpop.f32.mrf.mxu0
      %v608 = vadd.f32 %v258, %v607
      %609 = vmatprep.mubr.bf16.mxu0 0
      %610 = vmatmul.mubr.bf16.gmra.mxu0 %v506
      %v611 = vpop.f32.mrf.mxu0
      %v612 = vadd.f32 %v263, %v611
      %v613 = vpop.f32.mrf.mxu0
      %v614 = vadd.f32 %v263, %v613
      %v615 = vpop.f32.mrf.mxu0
      %v616 = vadd.f32 %v268, %v615
      %v617 = vpop.f32.mrf.mxu0
      %v618 = vadd.f32 %v268, %v617
      %619 = vmatprep.mubr.bf16.mxu0 0
      %620 = vmatmul.mubr.bf16.gmra.mxu0 %v509
      %v621 = vpop.f32.mrf.mxu0
      %v622 = vadd.f32 %v273, %v621
      %v623 = vpop.f32.mrf.mxu0
      %v624 = vadd.f32 %v273, %v623
      %v625 = vpop.f32.mrf.mxu0
      %v626 = vadd.f32 %v278, %v625
      %v627 = vpop.f32.mrf.mxu0
      %v628 = vadd.f32 %v278, %v627
      %629 = vmatprep.mubr.bf16.mxu0 0
      %630 = vmatmul.mubr.bf16.gmra.mxu0 %v512
      %v631 = vpop.f32.mrf.mxu0
      %v632 = vadd.f32 %v283, %v631
      %v633 = vpop.f32.mrf.mxu0
      %v634 = vadd.f32 %v283, %v633
      %v635 = vpop.f32.mrf.mxu0
      %v636 = vadd.f32 %v288, %v635
      %v637 = vpop.f32.mrf.mxu0
      %v638 = vadd.f32 %v288, %v637
      %639 = vmatprep.mubr.bf16.mxu0 0
      %640 = vmatmul.mubr.bf16.gmra.mxu0 %v515
      %v641 = vpop.f32.mrf.mxu0
      %v642 = vadd.f32 %v293, %v641
      %v643 = vpop.f32.mrf.mxu0
      %v644 = vadd.f32 %v293, %v643
      %v645 = vpop.f32.mrf.mxu0
      %v646 = vadd.f32 %v298, %v645
      %v647 = vpop.f32.mrf.mxu0
      %v648 = vadd.f32 %v298, %v647
      %649 = vmatprep.mubr.bf16.mxu0 0
      %650 = vmatmul.mubr.bf16.gmra.mxu0 %v518
      %v651 = vpop.f32.mrf.mxu0
      %v652 = vadd.f32 %v303, %v651
      %v653 = vpop.f32.mrf.mxu0
      %v654 = vadd.f32 %v303, %v653
      %v655 = vpop.f32.mrf.mxu0
      %v656 = vadd.f32 %v308, %v655
      %v657 = vpop.f32.mrf.mxu0
      %v658 = vadd.f32 %v308, %v657
      %659 = vmatprep.mubr.bf16.mxu0 0
      %660 = vmatmul.mubr.bf16.gmra.mxu0 %v521
      %v661 = vpop.f32.mrf.mxu0
      %v662 = vadd.f32 %v313, %v661
      %v663 = vpop.f32.mrf.mxu0
      %v664 = vadd.f32 %v313, %v663
      %v665 = vpop.f32.mrf.mxu0
      %v666 = vadd.f32 %v318, %v665
      %v667 = vpop.f32.mrf.mxu0
      %v668 = vadd.f32 %v318, %v667
      %669 = vmatprep.mubr.bf16.mxu0 0
      %670 = vmatmul.mubr.bf16.gmra.mxu0 %v524
      %v671 = vpop.f32.mrf.mxu0
      %v672 = vadd.f32 %v323, %v671
      %v673 = vpop.f32.mrf.mxu0
      %v674 = vadd.f32 %v323, %v673
      %v675 = vpop.f32.mrf.mxu0
      %v676 = vadd.f32 %v328, %v675
      %v677 = vpop.f32.mrf.mxu0
      %v678 = vadd.f32 %v328, %v677
      %679 = vmatprep.mubr.bf16.mxu0 0
      %680 = vmatmul.mubr.bf16.gmra.mxu0 %v527
      %v681 = vpop.f32.mrf.mxu0
      %v682 = vadd.f32 %v333, %v681
      %v683 = vpop.f32.mrf.mxu0
      %v684 = vadd.f32 %v333, %v683
      %v685 = vpop.f32.mrf.mxu0
      %v686 = vadd.f32 %v338, %v685
      %v687 = vpop.f32.mrf.mxu0
      %v688 = vadd.f32 %v338, %v687
      %689 = vmatprep.mubr.bf16.mxu0 0
      %690 = vmatmul.mubr.bf16.gmra.mxu0 %v530
      %v691 = vpop.f32.mrf.mxu0
      %v692 = vadd.f32 %v343, %v691
      %v693 = vpop.f32.mrf.mxu0
      %v694 = vadd.f32 %v343, %v693
      %v695 = vpop.f32.mrf.mxu0
      %v696 = vadd.f32 %v348, %v695
      %v697 = vpop.f32.mrf.mxu0
      %v698 = vadd.f32 %v348, %v697
      %699 = vmatprep.mubr.bf16.mxu0 0
      %700 = vmatmul.mubr.bf16.gmra.mxu0 %v533
      %v701 = vpop.f32.mrf.mxu0
      %v702 = vadd.f32 %v353, %v701
      %v703 = vpop.f32.mrf.mxu0
      %v704 = vadd.f32 %v353, %v703
      %v705 = vpop.f32.mrf.mxu0
      %v706 = vadd.f32 %v358, %v705
      %v707 = vpop.f32.mrf.mxu0
      %v708 = vadd.f32 %v358, %v707
      %709 = vmatprep.mubr.bf16.mxu0 0
      %710 = vmatmul.mubr.bf16.gmra.mxu0 %v536
      %v711 = vpop.f32.mrf.mxu0
      %v712 = vadd.f32 %v363, %v711
      %v713 = vpop.f32.mrf.mxu0
      %v714 = vadd.f32 %v363, %v713
      %v715 = vpop.f32.mrf.mxu0
      %v716 = vadd.f32 %v368, %v715
      %v717 = vpop.f32.mrf.mxu0
      %v718 = vadd.f32 %v368, %v717
      %719 = vmatprep.mubr.bf16.mxu0 0
      %720 = vmatmul.mubr.bf16.gmra.mxu0 %v539
      %v721 = vpop.f32.mrf.mxu0
      %v722 = vadd.f32 %v373, %v721
      %v723 = vpop.f32.mrf.mxu0
      %v724 = vadd.f32 %v373, %v723
      %v725 = vpop.f32.mrf.mxu0
      %v726 = vadd.f32 %v378, %v725
      %v727 = vpop.f32.mrf.mxu0
      %v728 = vadd.f32 %v378, %v727
      %729 = vmatprep.mubr.bf16.mxu0 0
      %730 = vmatmul.mubr.bf16.gmra.mxu0 %v542
      %v731 = vpop.f32.mrf.mxu0
      %v732 = vadd.f32 %v383, %v731
      %v733 = vpop.f32.mrf.mxu0
      %v734 = vadd.f32 %v383, %v733
      %v735 = vpop.f32.mrf.mxu0
      %v736 = vadd.f32 %v388, %v735
      %v737 = vpop.f32.mrf.mxu0
      %v738 = vadd.f32 %v388, %v737
      %739 = vmatprep.mubr.bf16.mxu0 0
      %740 = vmatmul.mubr.bf16.gmra.mxu0 %v545
      %v741 = vpop.f32.mrf.mxu0
      %v742 = vadd.f32 %v393, %v741
      %v743 = vpop.f32.mrf.mxu0
      %v744 = vadd.f32 %v393, %v743
      %v745 = vpop.f32.mrf.mxu0
      %v746 = vadd.f32 %v398, %v745
      %v747 = vpop.f32.mrf.mxu0
      %v748 = vadd.f32 %v398, %v747
      %749 = vdwg.mxu0
      %750 = vst [vmem:[%s170] sm:$0xff] %v592
      %vm751 = vcmask 556032
      %752 = vst.msk [vmem:[%s170 + $0x8] sm:$0xff] %vm751, %v594
      %753 = vst [vmem:[%s170 + $0x10] sm:$0xff] %v596
      %754 = vst.msk [vmem:[%s170 + $0x18] sm:$0xff] %vm751, %v598
      %755 = vst [vmem:[%s170 + $0x20] sm:$0xff] %v602
      %756 = vst.msk [vmem:[%s170 + $0x28] sm:$0xff] %vm751, %v604
      %757 = vst [vmem:[%s170 + $0x30] sm:$0xff] %v606
      %758 = vst.msk [vmem:[%s170 + $0x38] sm:$0xff] %vm751, %v608
      %759 = vst [vmem:[%s170 + $0x40] sm:$0xff] %v612
      %760 = vst.msk [vmem:[%s170 + $0x48] sm:$0xff] %vm751, %v614
      %761 = vst [vmem:[%s170 + $0x50] sm:$0xff] %v616
      %762 = vst.msk [vmem:[%s170 + $0x58] sm:$0xff] %vm751, %v618
      %763 = vst [vmem:[%s170 + $0x60] sm:$0xff] %v622
      %764 = vst.msk [vmem:[%s170 + $0x68] sm:$0xff] %vm751, %v624
      %765 = vst [vmem:[%s170 + $0x70] sm:$0xff] %v626
      %766 = vst.msk [vmem:[%s170 + $0x78] sm:$0xff] %vm751, %v628
      %767 = vst [vmem:[%s170 + $0x80] sm:$0xff] %v632
      %768 = vst.msk [vmem:[%s170 + $0x88] sm:$0xff] %vm751, %v634
      %769 = vst [vmem:[%s170 + $0x90] sm:$0xff] %v636
      %770 = vst.msk [vmem:[%s170 + $0x98] sm:$0xff] %vm751, %v638
      %771 = vst [vmem:[%s170 + $0xa0] sm:$0xff] %v642
      %772 = vst.msk [vmem:[%s170 + $0xa8] sm:$0xff] %vm751, %v644
      %773 = vst [vmem:[%s170 + $0xb0] sm:$0xff] %v646
      %774 = vst.msk [vmem:[%s170 + $0xb8] sm:$0xff] %vm751, %v648
      %775 = vst [vmem:[%s170 + $0xc0] sm:$0xff] %v652
      %776 = vst.msk [vmem:[%s170 + $0xc8] sm:$0xff] %vm751, %v654
      %777 = vst [vmem:[%s170 + $0xd0] sm:$0xff] %v656
      %778 = vst.msk [vmem:[%s170 + $0xd8] sm:$0xff] %vm751, %v658
      %779 = vst [vmem:[%s170 + $0xe0] sm:$0xff] %v662
      %780 = vst.msk [vmem:[%s170 + $0xe8] sm:$0xff] %vm751, %v664
      %781 = vst [vmem:[%s170 + $0xf0] sm:$0xff] %v666
      %782 = vst.msk [vmem:[%s170 + $0xf8] sm:$0xff] %vm751, %v668
      %783 = vst [vmem:[%s170 + $0x100] sm:$0xff] %v672
      %784 = vst.msk [vmem:[%s170 + $0x108] sm:$0xff] %vm751, %v674
      %785 = vst [vmem:[%s170 + $0x110] sm:$0xff] %v676
      %786 = vst.msk [vmem:[%s170 + $0x118] sm:$0xff] %vm751, %v678
      %787 = vst [vmem:[%s170 + $0x120] sm:$0xff] %v682
      %788 = vst.msk [vmem:[%s170 + $0x128] sm:$0xff] %vm751, %v684
      %789 = vst [vmem:[%s170 + $0x130] sm:$0xff] %v686
      %790 = vst.msk [vmem:[%s170 + $0x138] sm:$0xff] %vm751, %v688
      %791 = vst [vmem:[%s170 + $0x140] sm:$0xff] %v692
      %792 = vst.msk [vmem:[%s170 + $0x148] sm:$0xff] %vm751, %v694
      %793 = vst [vmem:[%s170 + $0x150] sm:$0xff] %v696
      %794 = vst.msk [vmem:[%s170 + $0x158] sm:$0xff] %vm751, %v698
      %795 = vst [vmem:[%s170 + $0x160] sm:$0xff] %v702
      %796 = vst.msk [vmem:[%s170 + $0x168] sm:$0xff] %vm751, %v704
      %797 = vst [vmem:[%s170 + $0x170] sm:$0xff] %v706
      %798 = vst.msk [vmem:[%s170 + $0x178] sm:$0xff] %vm751, %v708
      %799 = vst [vmem:[%s170 + $0x180] sm:$0xff] %v712
      %800 = vst.msk [vmem:[%s170 + $0x188] sm:$0xff] %vm751, %v714
      %801 = vst [vmem:[%s170 + $0x190] sm:$0xff] %v716
      %802 = vst.msk [vmem:[%s170 + $0x198] sm:$0xff] %vm751, %v718
      %803 = vst [vmem:[%s170 + $0x1a0] sm:$0xff] %v722
      %804 = vst.msk [vmem:[%s170 + $0x1a8] sm:$0xff] %vm751, %v724
      %805 = vst [vmem:[%s170 + $0x1b0] sm:$0xff] %v726
      %806 = vst.msk [vmem:[%s170 + $0x1b8] sm:$0xff] %vm751, %v728
      %807 = vst [vmem:[%s170 + $0x1c0] sm:$0xff] %v732
      %808 = vst.msk [vmem:[%s170 + $0x1c8] sm:$0xff] %vm751, %v734
      %809 = vst [vmem:[%s170 + $0x1d0] sm:$0xff] %v736
      %810 = vst.msk [vmem:[%s170 + $0x1d8] sm:$0xff] %vm751, %v738
      %811 = vst [vmem:[%s170 + $0x1e0] sm:$0xff] %v742
      %812 = vst.msk [vmem:[%s170 + $0x1e8] sm:$0xff] %vm751, %v744
      %813 = vst [vmem:[%s170 + $0x1f0] sm:$0xff] %v746
      %814 = vst.msk [vmem:[%s170 + $0x1f8] sm:$0xff] %vm751, %v748
      %p815 = scmp.lt.s32.totalorder %s14, 1
      %s816 = scalar_select %p815, %s14, 1
      %s817 = smul.addr %s816, 64
      %s818 = smul.addr %s817, 8
      %s819 = scalar_lea.vmem %s3, %s818
      // Predicated region
      $region33: #{conv_big_forward.1} parent=31 // pred_check
        %p820 = pneg %p100
      $region34: #{conv_big_forward.1} parent=31 // pred_check_branch
        %822 = sbr.rel (%p820) target = $region36
      $region35: #{conv_big_forward.1} parent=31 // pred_region
        _
      $region36: #{conv_big_forward.1} parent=31 // pred_fallthru
        _
    $region32: #{conv_big_forward.1} parent=5 // pred_fallthru
      _
    %p823 = scmp.le.s32.totalorder 2, %s9
    // Predicated region
    $region37: #{conv_big_forward.1} parent=5 // pred_check
      %p824 = pneg %p823
    $region38: #{conv_big_forward.1} parent=5 // pred_check_branch
      %826 = sbr.rel (%p824) target = $region40
    $region39: #{conv_big_forward.1} parent=5 // pred_region
      %s827 = ssub.s32 %s9, 2
      // Predicated region
      $region41: #{conv_big_forward.1} parent=39 // pred_check
        %p828 = pneg %p106
      $region42: #{conv_big_forward.1} parent=39 // pred_check_branch
        %830 = sbr.rel (%p828) target = $region44
      $region43: #{conv_big_forward.1} parent=39 // pred_region
        %p831 = scmp.lt.s32.totalorder %s15, 1
        %s832 = scalar_select %p831, %s15, 1
        %s833 = smul.addr %s832, 64
        %s834 = smul.addr %s833, 8
        %s835 = scalar_lea.vmem %s3, %s834
      $region44: #{conv_big_forward.1} parent=39 // pred_fallthru
        _
    $region40: #{conv_big_forward.1} parent=5 // pred_fallthru
      _
  $region6: #{conv_big_forward.1} parent=0 // loop_footer
    %s13 = sadd.s32 1, %s9
  $region7: #{conv_big_forward.1} parent=0 // loop_footer_branch
    %8 = sbr.rel target = $region3
  $region8: #{conv_big_forward.1} parent=0 // loop_exit
    _

</llo_original>
